<compile_context>
chip_gen: v7x
topology: tpu7x:2x2x1
jax: 0.10.0
libtpu: 0.0.40
codegen_flags: <defaults>
</compile_context>

<pallas_src>
import jax
import jax.numpy as jnp
from jax.experimental import pallas as pl
from jax.experimental.pallas import tpu as pltpu

_N_LEVELS = 255.0  # unsigned 8-bit activation quantization (2^8 - 1 levels above zero)

# Lane widths tried in order; first one that divides the element count wins (no pad, no copy).
_LANE_CANDIDATES = (8192, 4096, 2048, 1024, 512, 256, 128)
_RAGGED_LANE_CAP = 16384  # max lane width when falling back to a suffix-product lane


def _pact_quantrelu_kernel(params_ref, x_ref, o_ref):
    # params_ref: SMEM f32[3] = [safe_alpha, scale, inv_scale]  (scalar math hoisted)
    # x_ref / o_ref: VMEM tile (tile_rows, lane)
    alpha = params_ref[0]
    scale = params_ref[1]
    inv_scale = params_ref[2]

    x = x_ref[...].astype(jnp.float32)
    clipped = jnp.minimum(jnp.maximum(x, 0.0), alpha)   # PACT clip to [0, alpha]
    q = jnp.round(clipped * inv_scale)                   # integer levels in [0, 255]
    o_ref[...] = (q * scale).astype(o_ref.dtype)         # fake-quantized value


def _round_up(x, m):
    return ((x + m - 1) // m) * m


def _vmem_capacity_bytes():
    try:
        return int(pltpu.get_tpu_info().vmem_capacity_bytes)
    except Exception:
        return 64 << 20  # conservative (v7x-sized) fallback


def _factor_2d(shape):
    """Copy-free (rows, lane) factorization of a contiguous tensor."""
    shape = tuple(shape) if len(shape) else (1,)
    total = 1
    for d in shape:
        total *= d
    # Lane-dense path: largest multiple-of-128 lane that divides the element count.
    for lane in _LANE_CANDIDATES:
        if total % lane == 0:
            return total // lane, lane
    # Ragged path (no pad / no slice): lane = suffix product of the original dims, so the
    # reshape is free and the block's last dim equals the full array dim (always legal).
    lane = shape[-1]
    for d in reversed(shape[:-1]):
        if lane * d > _RAGGED_LANE_CAP:
            break
        lane *= d
    return total // lane, lane


def pact_quant_relu(x, alpha, *, out_dtype=None, in_place=False):
    """PACT clip + 8-bit fake-quant.

    x: float activation tensor (e.g. NCHW); alpha: python float or 0-d array (learned scalar).
    out_dtype: optional narrower output dtype (e.g. jnp.bfloat16) to halve write bandwidth.
    in_place: alias the output onto the (flattened) input buffer; use when the caller donates x.
    """
    orig_shape = x.shape
    in_dtype = x.dtype
    out_dt = jnp.dtype(in_dtype) if out_dtype is None else jnp.dtype(out_dtype)

    total = 1
    for d in orig_shape:
        total *= d
    if total == 0:
        return x.astype(out_dt)

    rows, lane = _factor_2d(orig_shape)
    x2d = x.reshape(rows, lane)  # contiguous -> free reshape, no HBM copy

    # Chip-aware block sizing (double-buffered in + out = ~4x block footprint).
    vmem_cap = _vmem_capacity_bytes()
    if vmem_cap >= (100 << 20):          # v5e / v6e: 128 MiB VMEM per TensorCore
        target_block_bytes, vmem_limit = 8 << 20, 64 << 20
    else:                                # v7x: 64 MiB VMEM per TensorCore
        target_block_bytes, vmem_limit = 4 << 20, 40 << 20

    itemsize = max(jnp.dtype(in_dtype).itemsize, out_dt.itemsize)
    budget_rows = max(8, (target_block_bytes // (itemsize * lane)) // 8 * 8)
    tile_rows = min(int(budget_rows), rows)

    # Ensure >= 2 grid blocks when possible so v7x's two TensorCores both get work.
    if rows >= 16 and tile_rows == rows:
        tile_rows = min(rows, _round_up(-(-rows // 2), 8))
    grid = (pl.cdiv(rows, tile_rows),)

    # Hoisted scalar math. safe_alpha guards alpha <= 0 (output degrades to ~0, not garbage).
    alpha_f = jnp.asarray(alpha, dtype=jnp.float32).reshape(())
    safe_alpha = jnp.maximum(alpha_f, jnp.float32(1e-12))
    scale = safe_alpha / jnp.float32(_N_LEVELS)
    inv_scale = jnp.float32(_N_LEVELS) / safe_alpha
    params = jnp.stack([safe_alpha, scale, inv_scale]).astype(jnp.float32)

    cost = pl.CostEstimate(
        flops=5 * total,
        transcendentals=0,
        bytes_accessed=total * (jnp.dtype(in_dtype).itemsize + out_dt.itemsize),
    )

    aliases = {}
    if in_place and out_dt == jnp.dtype(in_dtype):
        aliases = {1: 0}  # write result in place of x2d (input index 1 -> output 0)

    out2d = pl.pallas_call(
        _pact_quantrelu_kernel,
        out_shape=jax.ShapeDtypeStruct((rows, lane), out_dt),
        grid=grid,
        in_specs=[
            pl.BlockSpec(memory_space=pltpu.MemorySpace.SMEM),      # [alpha, scale, inv_scale]
            pl.BlockSpec((tile_rows, lane), lambda i: (i, 0)),      # x tile
        ],
        out_specs=pl.BlockSpec((tile_rows, lane), lambda i: (i, 0)),
        compiler_params=pltpu.CompilerParams(
            dimension_semantics=("parallel",),  # shard row blocks across v7x's 2 TCs
            vmem_limit_bytes=vmem_limit,
        ),
        cost_estimate=cost,
        input_output_aliases=aliases,
    )(params, x2d)

    return out2d.reshape(orig_shape)


def _reference(x, alpha):
    a = jnp.maximum(jnp.asarray(alpha, jnp.float32), jnp.float32(1e-12))
    scale = a / jnp.float32(_N_LEVELS)
    inv = jnp.float32(_N_LEVELS) / a
    clipped = jnp.clip(x.astype(jnp.float32), 0.0, a)
    return (jnp.round(clipped * inv) * scale).astype(x.dtype)


if __name__ == "__main__":
    key = jax.random.PRNGKey(0)
    alpha = 2.0  # deterministic scalar init (module __init__ takes alpha)

    # Small NCHW shape consistent with the module's forward.
    N, C, H, W = 2, 4, 16, 16
    x = jax.random.normal(key, (N, C, H, W), dtype=jnp.float32) * 3.0

    out = jax.block_until_ready(pact_quant_relu(x, alpha))
    ref = _reference(x, alpha)
    assert out.shape == x.shape and out.dtype == x.dtype
    assert jnp.allclose(out, ref, atol=1e-6), float(jnp.max(jnp.abs(out - ref)))
    assert float(jnp.min(out)) >= 0.0 and float(jnp.max(out)) <= alpha + 1e-5

    # Multi-block grid path (exercises >=2 blocks / megacore split and partial last block).
    x_big = jax.random.normal(jax.random.PRNGKey(2), (2, 8, 64, 128), dtype=jnp.float32) * 3.0
    out_big = jax.block_until_ready(pact_quant_relu(x_big, alpha))
    assert jnp.allclose(out_big, _reference(x_big, alpha), atol=1e-6)

    # Ragged-size path (copy-free suffix-product lane, no pad / no output slice).
    x_odd = jax.random.normal(jax.random.PRNGKey(1), (2, 3, 5, 7), dtype=jnp.float32) * 3.0
    out_odd = jax.block_until_ready(pact_quant_relu(x_odd, alpha))
    assert out_odd.shape == x_odd.shape
    assert jnp.allclose(out_odd, _reference(x_odd, alpha), atol=1e-6)

    # In-place (donated activation) path.
    out_ip = jax.block_until_ready(pact_quant_relu(x, alpha, in_place=True))
    assert jnp.allclose(out_ip, ref, atol=1e-6)

    # Narrow-output path (bf16 write halves output bandwidth when downstream tolerates it).
    out_bf16 = jax.block_until_ready(pact_quant_relu(x, alpha, out_dtype=jnp.bfloat16))
    assert out_bf16.dtype == jnp.bfloat16
    assert jnp.allclose(out_bf16.astype(jnp.float32), ref, atol=2e-2)

    print("KERNEL_OK")
</pallas_src>

<mosaic_0001>
module attributes {stable_mosaic.version = 11 : i64} {
  func.func @_pact_quantrelu_kernel(%arg0: i32, %arg1: memref<3xf32, #tpu.memory_space<smem>>, %arg2: memref<1x2048xf32, #tpu.memory_space<vmem>>, %arg3: memref<1x2048xf32, #tpu.memory_space<vmem>>) attributes {dimension_semantics = [#tpu.dimension_semantics<parallel>], iteration_bounds = array<i64: 1>, scalar_prefetch = 0 : i64, scratch_operands = 0 : i64, tpu.core_type = #tpu.core_type<tc>, window_params = [{transform_indices = @transform_0, window_bounds = array<i64: 3>}, {transform_indices = @transform_1, window_bounds = array<i64: 1, 2048>}, {transform_indices = @transform_2, window_bounds = array<i64: 1, 2048>}]} {
    %c0 = arith.constant 0 : index
    %0 = memref.load %arg1[%c0] : memref<3xf32, #tpu.memory_space<smem>>
    %c1 = arith.constant 1 : index
    %1 = memref.load %arg1[%c1] : memref<3xf32, #tpu.memory_space<smem>>
    %c2 = arith.constant 2 : index
    %2 = memref.load %arg1[%c2] : memref<3xf32, #tpu.memory_space<smem>>
    %c0_0 = arith.constant 0 : index
    %c0_1 = arith.constant 0 : index
    %3 = vector.load %arg2[%c0_0, %c0_1] : memref<1x2048xf32, #tpu.memory_space<vmem>>, vector<1x2048xf32>
    %cst = arith.constant 0.000000e+00 : f32
    %4 = vector.broadcast %cst : f32 to vector<1x2048xf32>
    %5 = arith.maximumf %3, %4 : vector<1x2048xf32>
    %6 = vector.broadcast %0 : f32 to vector<1x2048xf32>
    %7 = arith.minimumf %5, %6 : vector<1x2048xf32>
    %8 = vector.broadcast %2 : f32 to vector<1x2048xf32>
    %9 = arith.mulf %7, %8 : vector<1x2048xf32>
    %10 = math.roundeven %9 : vector<1x2048xf32>
    %11 = vector.broadcast %1 : f32 to vector<1x2048xf32>
    %12 = arith.mulf %10, %11 : vector<1x2048xf32>
    %c0_2 = arith.constant 0 : index
    %c0_3 = arith.constant 0 : index
    %13 = vector.load %arg3[%c0_2, %c0_3] : memref<1x2048xf32, #tpu.memory_space<vmem>>, vector<1x2048xf32>
    tpu.vector_store %arg3[%c0_2, %c0_3], %12 {strides = array<i32>} : memref<1x2048xf32, #tpu.memory_space<vmem>>, vector<1x2048xf32>,
    return
  }
  func.func @transform_0(%arg0: i32) -> i32 {
    %c0_i32 = arith.constant 0 : i32
    %c0_i32_0 = arith.constant 0 : i32
    return %c0_i32 : i32
  }
  func.func @transform_1(%arg0: i32) -> (i32, i32) {
    %c0_i32 = arith.constant 0 : i32
    %c0_i32_0 = arith.constant 0 : i32
    return %arg0, %c0_i32 : i32, i32
  }
  func.func @transform_2(%arg0: i32) -> (i32, i32) {
    %c0_i32 = arith.constant 0 : i32
    %c0_i32_0 = arith.constant 0 : i32
    return %arg0, %c0_i32 : i32, i32
  }
}

</mosaic_0001>

<llo_original>
// kernel: tpu_custom_call.1
$region0: #{tpu_custom_call.1}
  #allocation0 [shape = 'u32[]', space=smem, size = 0x4, offset = 0x4, fixed_abs, tag = 'smem constant byte address 0x4 - core index']
  #allocation1 [shape = 'u32[144,128]{1,0:T(1,128)}', space=vmem, size = 0x12000, scoped, tag = 'internal scratch']
  %s0 = inlined_call_operand.hbm [shape: f32[3], index: 0, kind: input, shape index: {}]
  %s1 = inlined_call_operand.hbm [shape: f32[1,2048], index: 1, kind: input, shape index: {}]
  %s2 = inlined_call_operand.hbm [shape: f32[1,2048], index: 2, kind: output, shape index: {}]
  %s3 = sld [smem:[#allocation0]]
  $region26: #{tpu_custom_call.1} parent=0
    _
  %s5 = ssub.s32 1, %s3
  %s6 = scalar_select 0, %s5, %s3
  $region1: #{tpu_custom_call.1} parent=0
    #allocation2 [shape = 'u8[512]{0}', space=smem, size = 0x200, scoped, tag = 'input window, operand 0, single buffered']
    #allocation3 [shape = 's32[1]{0}', space=sflag, size = 0x4, scoped, tag = 'scoped memory for tpu_custom_call.1']
    #allocation4 [shape = 's32[1]{0}', space=sflag, size = 0x4, scoped, tag = 'scoped memory for tpu_custom_call.1']
    #allocation5 [shape = 's32[1]{0}', space=sflag, size = 0x4, scoped, tag = 'scoped memory for tpu_custom_call.1']
    #allocation6 [shape = 'u8[8192]{0}', space=vmem, size = 0x2000, scoped, tag = 'input window, operand 1, single buffered']
    #allocation7 [shape = 'u8[8192]{0}', space=vmem, size = 0x2000, scoped, tag = 'output window, operand 0, single buffered']
    %7 = vsyncpa [#allocation5], 0
    %8 = vsyncpa [#allocation3], 0
    %9 = vsyncpa [#allocation4], 0
    // Predicated region
    $region2: #{tpu_custom_call.1} parent=1 // pred_check
      _
    $region3: #{tpu_custom_call.1} parent=1 // pred_check_branch
      %11 = sbr.rel (0) target = $region5
    $region4: #{tpu_custom_call.1} parent=1 // pred_region
      %s13 = ssub.s32 16, 16
      %14 = vsyncadd [#allocation5], %s13
      %17 = dma.hbm_to_smem %s0, 16, [#allocation2], [#allocation5]
    $region5: #{tpu_custom_call.1} parent=1 // pred_fallthru
      _
    // Predicated region
    $region6: #{tpu_custom_call.1} parent=1 // pred_check
      _
    $region7: #{tpu_custom_call.1} parent=1 // pred_check_branch
      %19 = sbr.rel (0) target = $region9
    $region8: #{tpu_custom_call.1} parent=1 // pred_region
      %s21 = ssub.s32 256, 256
      %22 = vsyncadd [#allocation3], %s21
      %s24 = sshll.u32 [#allocation6], 4
      %s25 = int_to_ptr.vmem [resolvable:$true] %s24
      %27 = dma.hbm_to_vmem [thread:$0]  %s1, 256, %s25, [#allocation3]
    $region9: #{tpu_custom_call.1} parent=1 // pred_fallthru
      _
    // Predicated region
    $region10: #{tpu_custom_call.1} parent=1 // pred_check
      _
    $region11: #{tpu_custom_call.1} parent=1 // pred_check_branch
      %29 = sbr.rel (0) target = $region13
    $region12: #{tpu_custom_call.1} parent=1 // pred_region
      %30 = dma.done [#allocation5], 16
    $region13: #{tpu_custom_call.1} parent=1 // pred_fallthru
      _
    // Predicated region
    $region14: #{tpu_custom_call.1} parent=1 // pred_check
      _
    $region15: #{tpu_custom_call.1} parent=1 // pred_check_branch
      %32 = sbr.rel (0) target = $region17
    $region16: #{tpu_custom_call.1} parent=1 // pred_region
      %33 = dma.done [#allocation3], 256
    $region17: #{tpu_custom_call.1} parent=1 // pred_fallthru
      _
    %34 = sfence
    %s35 = sld [smem:[#allocation2]]
    %s36 = sld [smem:[#allocation2 + $0x1]]
    %s37 = sld [smem:[#allocation2 + $0x2]]
    %v38 = vld [vmem:[#allocation6] sm:$0xff]
    %v39 = vld [vmem:[#allocation6 + $0x8] sm:$0xff]
    %v40 = vmax.f32 %v38, 0.0
    %v41 = vmax.f32 %v39, 0.0
    %v42 = vstv %s35
    %v43 = vmin.f32 %v40, %v42
    %v44 = vmin.f32 %v41, %v42
    %v45 = vstv %s37
    %v46 = vmul.f32 %v43, %v45
    %v47 = vmul.f32 %v44, %v45
    %v48 = vround.ne.pseudo %v46
    %v49 = vround.ne.pseudo %v47
    %v50 = vstv %s36
    %v51 = vmul.f32 %v48, %v50
    %v52 = vmul.f32 %v49, %v50
    %53 = vst [vmem:[#allocation7] sm:$0xff] %v51
    %54 = vst [vmem:[#allocation7 + $0x8] sm:$0xff] %v52
    // Predicated region
    $region18: #{tpu_custom_call.1} parent=1 // pred_check
      _
    $region19: #{tpu_custom_call.1} parent=1 // pred_check_branch
      %56 = sbr.rel (0) target = $region21
    $region20: #{tpu_custom_call.1} parent=1 // pred_region
      %s58 = ssub.s32 256, 256
      %59 = vsyncadd [#allocation4], %s58
      %s61 = sshll.u32 [#allocation7], 4
      %s62 = int_to_ptr.vmem [resolvable:$true] %s61
      %64 = dma.vmem_to_hbm [thread:$0]  %s62, 256, %s2, [#allocation4]
    $region21: #{tpu_custom_call.1} parent=1 // pred_fallthru
      _
    // Predicated region
    $region22: #{tpu_custom_call.1} parent=1 // pred_check
      _
    $region23: #{tpu_custom_call.1} parent=1 // pred_check_branch
      %66 = sbr.rel (0) target = $region25
    $region24: #{tpu_custom_call.1} parent=1 // pred_region
      %67 = dma.done [#allocation4], 256
    $region25: #{tpu_custom_call.1} parent=1 // pred_fallthru
      _
    %68 = vsyncpa [#allocation3], 1
    %69 = vsyncpa [#allocation4], 1
    %70 = vsyncpa [#allocation5], 1

</llo_original>
